<compile_context>
chip_gen: v7x
topology: tpu7x:2x2x1
jax: 0.10.0
libtpu: 0.0.40
codegen_flags: <defaults>
</compile_context>

<pallas_src>
import functools

import jax
import jax.numpy as jnp
from jax.experimental import pallas as pl
from jax.experimental.pallas import tpu as pltpu


def _round_up(v, m):
    return (v + m - 1) // m * m


def _cdiv(a, b):
    return (a + b - 1) // b


# ---------------------------------------------------------------------------
# Kernels
# ---------------------------------------------------------------------------

def _resnet_block_kernel_shortcut(x_ref, w0_ref, b0_ref, w1_ref, b1_ref,
                                  ws_ref, o_ref):
    """Fused relu -> fc_0 -> relu -> fc_1 plus learned (bias-free) shortcut.

    x may arrive as bf16 (padded path) or f32 (aligned pass-through path);
    ReLU commutes with the bf16 cast so both give identical MXU operands.
    Elementwise math is done in f32 (v5e-safe VPU), MXU operands in bf16,
    accumulation in f32.
    """
    x = x_ref[...]                                    # (tm, K) bf16 or f32
    x32 = x.astype(jnp.float32)
    h0 = jnp.maximum(x32, 0.0).astype(jnp.bfloat16)           # actvn(x)
    net = jnp.dot(h0, w0_ref[...],
                  preferred_element_type=jnp.float32) + b0_ref[...]
    h1 = jnp.maximum(net, 0.0).astype(jnp.bfloat16)           # actvn(net)
    dx = jnp.dot(h1, w1_ref[...],
                 preferred_element_type=jnp.float32) + b1_ref[...]
    x_s = jnp.dot(x.astype(jnp.bfloat16), ws_ref[...],
                  preferred_element_type=jnp.float32)
    o_ref[...] = (x_s + dx).astype(o_ref.dtype)


def _resnet_block_kernel_identity(x_ref, w0_ref, b0_ref, w1_ref, b1_ref,
                                  o_ref):
    """Same as above but the shortcut is the identity (size_in == size_out).

    x is kept in f32 so the residual add x + dx is exact.
    """
    x = x_ref[...].astype(jnp.float32)
    h0 = jnp.maximum(x, 0.0).astype(jnp.bfloat16)
    net = jnp.dot(h0, w0_ref[...],
                  preferred_element_type=jnp.float32) + b0_ref[...]
    h1 = jnp.maximum(net, 0.0).astype(jnp.bfloat16)
    dx = jnp.dot(h1, w1_ref[...],
                 preferred_element_type=jnp.float32) + b1_ref[...]
    o_ref[...] = (x + dx).astype(o_ref.dtype)


# ---------------------------------------------------------------------------
# Wrapper helpers
# ---------------------------------------------------------------------------

def _const_spec(shape):
    """BlockSpec for a resident operand (constant index_map).

    Single-buffered: the block never changes across the row grid, so the
    default double-buffering would only double its VMEM footprint.
    """
    idx = lambda i: (0,) * len(shape)
    try:
        return pl.BlockSpec(shape, idx, pipeline_mode=pl.Buffered(1))
    except TypeError:  # older jax without pipeline_mode on BlockSpec
        return pl.BlockSpec(shape, idx)


def _vmem_cap_bytes():
    """<= 0.75x of the physical VMEM of the chip we are tracing for."""
    cap = 128 << 20
    try:
        info = pltpu.get_tpu_info()
        hw = int(getattr(info, "vmem_capacity_bytes", 0))
        if hw > 0:
            cap = hw
    except Exception:
        pass
    return int(0.75 * cap)


def _choose_row_tile(n, tm):
    """Pick (tm_eff, n_padded) for the row grid.

    Ensures >= 2 (and even) grid steps whenever the batch allows so the
    "parallel" row axis can be split across both v7x TensorCores with a
    balanced load, while never exceeding the requested tm.
    """
    steps = max(1, _cdiv(n, tm))
    if steps == 1 and n > 8:
        steps = 2                      # use both TCs even for n <= tm
    if steps > 1 and steps % 2 == 1:
        steps += 1                     # even step count -> balanced megacore
    tm_eff = _round_up(_cdiv(n, steps), 8)
    n_p = _round_up(n, tm_eff)
    return tm_eff, n_p


def prepare_params(params):
    """One-time preprocessing of the block's parameters.

    Pads every feature dim to a multiple of 128 (lane-dense, full MXU passes;
    zero padding is exact) and casts weights to bf16 / biases to f32.  Doing
    this once removes the per-call HBM round trips of every weight matrix.

    params: w0 (size_in, size_h), b0 (1, size_h), w1 (size_h, size_out),
            b1 (1, size_out), optional ws (size_in, size_out).
    Returns (prepared_arrays_dict, (size_in, size_h, size_out)).
    """
    w0 = jnp.asarray(params["w0"], jnp.float32)
    b0 = jnp.asarray(params["b0"], jnp.float32)
    w1 = jnp.asarray(params["w1"], jnp.float32)
    b1 = jnp.asarray(params["b1"], jnp.float32)
    size_in, size_h = w0.shape
    size_out = w1.shape[1]

    k_p = _round_up(size_in, 128)
    h_p = _round_up(size_h, 128)
    o_p = _round_up(size_out, 128)
    # NOTE: on v6e/v7x, rounding h_p/o_p up to 256 when they land at an odd
    # multiple of 128 would fill both MXU column halves; only worth it when
    # compute-bound, so we keep 128-alignment here.

    prepared = {
        "w0": jnp.pad(w0, ((0, k_p - size_in), (0, h_p - size_h))
                      ).astype(jnp.bfloat16),
        "b0": jnp.pad(b0, ((0, 0), (0, h_p - size_h))),
        "w1": jnp.pad(w1, ((0, h_p - size_h), (0, o_p - size_out))
                      ).astype(jnp.bfloat16),
        "b1": jnp.pad(b1, ((0, 0), (0, o_p - size_out))),
    }
    if "ws" in params and params["ws"] is not None:
        ws = jnp.asarray(params["ws"], jnp.float32)
        prepared["ws"] = jnp.pad(
            ws, ((0, k_p - size_in), (0, o_p - size_out))).astype(jnp.bfloat16)
    return prepared, (size_in, size_h, size_out)


@functools.partial(jax.jit, static_argnames=("size_in", "size_out", "tm"))
def _resnet_block_fc_impl(x, w0, b0, w1, b1, ws, *, size_in, size_out, tm):
    lead = x.shape[:-1]
    x2 = x.reshape(-1, size_in)
    n = x2.shape[0]
    out_dtype = x.dtype

    k_p, h_p = w0.shape
    o_p = w1.shape[1]
    has_shortcut = ws is not None

    tm_eff, n_p = _choose_row_tile(n, tm)
    need_pad = (n_p != n) or (k_p != size_in)

    # --- x staging ---------------------------------------------------------
    if has_shortcut:
        if need_pad:
            # Pad is unavoidable; fuse the bf16 cast into it so both the
            # padded-x write and the kernel's input DMA are halved.
            x_in = jnp.pad(x2.astype(jnp.bfloat16),
                           ((0, n_p - n), (0, k_p - size_in)))
        else:
            # Aligned: skip all wrapper traffic; kernel casts per-operand.
            x_in = x2
    else:
        # Identity shortcut: keep f32 so the residual add is exact.
        x_f32 = x2.astype(jnp.float32)
        if need_pad:
            x_in = jnp.pad(x_f32, ((0, n_p - n), (0, k_p - size_in)))
        else:
            x_in = x_f32

    # --- grid / specs -------------------------------------------------------
    grid = (n_p // tm_eff,)
    x_spec = pl.BlockSpec((tm_eff, k_p), lambda i: (i, 0))
    out_spec = pl.BlockSpec((tm_eff, o_p), lambda i: (i, 0))
    w0_spec = _const_spec((k_p, h_p))
    b0_spec = _const_spec((1, h_p))
    w1_spec = _const_spec((h_p, o_p))
    b1_spec = _const_spec((1, o_p))
    out_shape = jax.ShapeDtypeStruct((n_p, o_p), out_dtype)

    # --- VMEM budget (pipelined tiles + resident weights + intermediates) ---
    x_bytes = jnp.dtype(x_in.dtype).itemsize
    o_bytes = jnp.dtype(out_dtype).itemsize
    pipeline_bytes = 2 * tm_eff * k_p * x_bytes + 2 * tm_eff * o_p * o_bytes
    w_elems = k_p * h_p + h_p * o_p + (k_p * o_p if has_shortcut else 0)
    resident_bytes = w_elems * 2 + (h_p + o_p) * 4      # single-buffered
    # in-kernel temporaries: f32 relu copy, bf16 MXU operands, f32 accum/adds
    scratch_bytes = tm_eff * (8 * k_p + 8 * h_p + 14 * o_p)
    budget = int(1.25 * (pipeline_bytes + resident_bytes + scratch_bytes))
    cap = _vmem_cap_bytes()
    vmem_limit = min(max(budget, min(32 << 20, cap)), cap)

    cparams = pltpu.CompilerParams(dimension_semantics=("parallel",),
                                   vmem_limit_bytes=vmem_limit)

    # --- launch --------------------------------------------------------------
    if has_shortcut:
        ws_spec = _const_spec((k_p, o_p))
        out = pl.pallas_call(
            _resnet_block_kernel_shortcut,
            out_shape=out_shape,
            grid_spec=pltpu.PrefetchScalarGridSpec(
                num_scalar_prefetch=0,
                grid=grid,
                in_specs=[x_spec, w0_spec, b0_spec, w1_spec, b1_spec, ws_spec],
                out_specs=out_spec,
            ),
            compiler_params=cparams,
        )(x_in, w0, b0, w1, b1, ws)
    else:
        out = pl.pallas_call(
            _resnet_block_kernel_identity,
            out_shape=out_shape,
            grid_spec=pltpu.PrefetchScalarGridSpec(
                num_scalar_prefetch=0,
                grid=grid,
                in_specs=[x_spec, w0_spec, b0_spec, w1_spec, b1_spec],
                out_specs=out_spec,
            ),
            compiler_params=cparams,
        )(x_in, w0, b0, w1, b1)

    if n_p != n or o_p != size_out:
        out = out[:n, :size_out]
    return out.reshape(*lead, size_out)


def resnet_block_fc(x, prepared, sizes, tm=512):
    """Apply the ResnetBlockFC forward pass.

    x:        (..., size_in) array (f32 or bf16).
    prepared: output of prepare_params (padded/cast weights & biases).
    sizes:    (size_in, size_h, size_out) tuple from prepare_params.
    """
    size_in, _, size_out = sizes
    assert x.shape[-1] == size_in, (x.shape, size_in)
    return _resnet_block_fc_impl(x, prepared["w0"], prepared["b0"],
                                 prepared["w1"], prepared["b1"],
                                 prepared.get("ws"),
                                 size_in=size_in, size_out=size_out, tm=tm)


# ---------------------------------------------------------------------------
# Test / demo
# ---------------------------------------------------------------------------

def init_params(key, size_in, size_out=None, size_h=None):
    """Deterministic synthetic init mirroring ResnetBlockFC.__init__ shapes.

    fc_1.weight is zero-initialized (as in the module); other params get small
    uniform values (stand-in for PyTorch's default Linear init).  Weights are
    stored pre-transposed as (in, out) == PyTorch weight.T.
    """
    if size_out is None:
        size_out = size_in
    if size_h is None:
        size_h = min(size_in, size_out)
    k0, k1, k2, k3 = jax.random.split(key, 4)
    bound0 = 1.0 / jnp.sqrt(size_in)
    bound1 = 1.0 / jnp.sqrt(size_h)
    params = {
        "w0": jax.random.uniform(k0, (size_in, size_h), jnp.float32,
                                 -bound0, bound0),
        "b0": jax.random.uniform(k1, (1, size_h), jnp.float32,
                                 -bound0, bound0),
        "w1": jnp.zeros((size_h, size_out), jnp.float32),   # nn.init.zeros_
        "b1": jax.random.uniform(k2, (1, size_out), jnp.float32,
                                 -bound1, bound1),
    }
    if size_in != size_out:
        params["ws"] = jax.random.uniform(k3, (size_in, size_out), jnp.float32,
                                          -bound0, bound0)
    return params


def _reference(x, params):
    """Plain-JAX f32 reference for correctness checking."""
    h0 = jnp.maximum(x, 0.0)
    net = h0 @ params["w0"] + params["b0"]
    dx = jnp.maximum(net, 0.0) @ params["w1"] + params["b1"]
    x_s = x @ params["ws"] if "ws" in params else x
    return x_s + dx


if __name__ == "__main__":
    key = jax.random.PRNGKey(0)
    kx, kp1, kp2, kw, kx3, kp3 = jax.random.split(key, 6)

    # bf16 MXU operands with f32 accumulation -> compare to f32 reference
    # loosely (error grows with contraction depth, hence the larger tolerance
    # for the bigger case 4).
    ATOL = 2e-2
    RTOL = 2e-2

    # Case 1: size_in != size_out -> learned linear shortcut; leading batch
    # dims get flattened (x is (2, 8, 32)).
    size_in, size_h, size_out = 32, 16, 64
    x = jax.random.normal(kx, (2, 8, size_in), jnp.float32)
    params = init_params(kp1, size_in, size_out, size_h)
    prep1, sizes1 = prepare_params(params)
    out = resnet_block_fc(x, prep1, sizes1)
    jax.block_until_ready(out)
    ref = _reference(x.reshape(-1, size_in), params).reshape(2, 8, size_out)
    assert out.shape == (2, 8, size_out)
    assert jnp.allclose(out, ref, atol=ATOL, rtol=RTOL)

    # Case 2: size_in == size_out -> identity shortcut (exact f32 residual).
    params2 = init_params(kp2, size_in)   # size_out = size_h = size_in = 32
    prep2, sizes2 = prepare_params(params2)
    out2 = resnet_block_fc(x, prep2, sizes2)
    jax.block_until_ready(out2)
    ref2 = _reference(x.reshape(-1, size_in), params2).reshape(2, 8, size_in)
    assert out2.shape == (2, 8, size_in)
    assert jnp.allclose(out2, ref2, atol=ATOL, rtol=RTOL)

    # Case 3: non-zero fc_1 weight, ragged batch (n=21 -> padded rows, 2-step
    # row grid), exercising the full fused path and the padded-tail handling.
    params3 = dict(params)
    params3["w1"] = jax.random.uniform(kw, (size_h, size_out), jnp.float32,
                                       -0.25, 0.25)
    prep3, sizes3 = prepare_params(params3)
    x3 = jax.random.normal(kx3, (3, 7, size_in), jnp.float32)
    out3 = resnet_block_fc(x3, prep3, sizes3)
    jax.block_until_ready(out3)
    ref3 = _reference(x3.reshape(-1, size_in), params3).reshape(3, 7, size_out)
    assert out3.shape == (3, 7, size_out)
    assert jnp.allclose(out3, ref3, atol=ATOL, rtol=RTOL)

    # Case 4: larger, MXU-friendly shapes -- 128-aligned feature dims, batch
    # already tile-aligned (no wrapper pad), 2-step "parallel" row grid.
    big_in, big_h, big_out, big_n = 128, 128, 256, 512
    params4 = init_params(kp3, big_in, big_out, big_h)
    params4["w1"] = jax.random.uniform(kw, (big_h, big_out), jnp.float32,
                                       -0.08, 0.08)
    prep4, sizes4 = prepare_params(params4)
    x4 = jax.random.normal(kx, (big_n, big_in), jnp.float32)
    out4 = resnet_block_fc(x4, prep4, sizes4)
    jax.block_until_ready(out4)
    ref4 = _reference(x4, params4)
    assert out4.shape == (big_n, big_out)
    assert jnp.allclose(out4, ref4, atol=5e-2, rtol=5e-2)

    print("KERNEL_OK")
</pallas_src>

<mosaic_0001>
module attributes {stable_mosaic.version = 11 : i64} {
  func.func @_resnet_block_kernel_shortcut(%arg0: i32, %arg1: memref<8x128xbf16, #tpu.memory_space<vmem>>, %arg2: memref<128x128xbf16, #tpu.memory_space<vmem>>, %arg3: memref<1x128xf32, #tpu.memory_space<vmem>>, %arg4: memref<128x128xbf16, #tpu.memory_space<vmem>>, %arg5: memref<1x128xf32, #tpu.memory_space<vmem>>, %arg6: memref<128x128xbf16, #tpu.memory_space<vmem>>, %arg7: memref<8x128xf32, #tpu.memory_space<vmem>>) attributes {dimension_semantics = [#tpu.dimension_semantics<parallel>], iteration_bounds = array<i64: 2>, scalar_prefetch = 0 : i64, scratch_operands = 0 : i64, tpu.core_type = #tpu.core_type<tc>, window_params = [{transform_indices = @transform_0, window_bounds = array<i64: 8, 128>}, {pipeline_mode = #tpu.pipeline_mode<synchronous>, transform_indices = @transform_1, window_bounds = array<i64: 128, 128>}, {pipeline_mode = #tpu.pipeline_mode<synchronous>, transform_indices = @transform_2, window_bounds = array<i64: 1, 128>}, {pipeline_mode = #tpu.pipeline_mode<synchronous>, transform_indices = @transform_3, window_bounds = array<i64: 128, 128>}, {pipeline_mode = #tpu.pipeline_mode<synchronous>, transform_indices = @transform_4, window_bounds = array<i64: 1, 128>}, {pipeline_mode = #tpu.pipeline_mode<synchronous>, transform_indices = @transform_5, window_bounds = array<i64: 128, 128>}, {transform_indices = @transform_6, window_bounds = array<i64: 8, 128>}]} {
    %c0 = arith.constant 0 : index
    %c0_0 = arith.constant 0 : index
    %0 = vector.load %arg1[%c0, %c0_0] : memref<8x128xbf16, #tpu.memory_space<vmem>>, vector<8x128xbf16>
    %1 = arith.extf %0 : vector<8x128xbf16> to vector<8x128xf32>
    %cst = arith.constant 0.000000e+00 : f32
    %2 = vector.broadcast %cst : f32 to vector<8x128xf32>
    %3 = arith.maximumf %1, %2 : vector<8x128xf32>
    %4 = arith.truncf %3 : vector<8x128xf32> to vector<8x128xbf16>
    %c0_1 = arith.constant 0 : index
    %c0_2 = arith.constant 0 : index
    %5 = vector.load %arg2[%c0_1, %c0_2] : memref<128x128xbf16, #tpu.memory_space<vmem>>, vector<128x128xbf16>
    %cst_3 = arith.constant dense<0.000000e+00> : vector<8x128xf32>
    %6 = tpu.matmul %4, %5, %cst_3 {dimension_numbers = #tpu.dot_dimension_numbers<[1], [0], [0], [1], [0, 0, 1, 1], [], []>} : vector<8x128xbf16>, vector<128x128xbf16>, vector<8x128xf32> -> vector<8x128xf32>
    %c0_4 = arith.constant 0 : index
    %c0_5 = arith.constant 0 : index
    %7 = vector.load %arg3[%c0_4, %c0_5] : memref<1x128xf32, #tpu.memory_space<vmem>>, vector<1x128xf32>
    %8 = vector.broadcast %7 : vector<1x128xf32> to vector<8x128xf32>
    %9 = arith.addf %6, %8 : vector<8x128xf32>
    %cst_6 = arith.constant 0.000000e+00 : f32
    %10 = vector.broadcast %cst_6 : f32 to vector<8x128xf32>
    %11 = arith.maximumf %9, %10 : vector<8x128xf32>
    %12 = arith.truncf %11 : vector<8x128xf32> to vector<8x128xbf16>
    %c0_7 = arith.constant 0 : index
    %c0_8 = arith.constant 0 : index
    %13 = vector.load %arg4[%c0_7, %c0_8] : memref<128x128xbf16, #tpu.memory_space<vmem>>, vector<128x128xbf16>
    %cst_9 = arith.constant dense<0.000000e+00> : vector<8x128xf32>
    %14 = tpu.matmul %12, %13, %cst_9 {dimension_numbers = #tpu.dot_dimension_numbers<[1], [0], [0], [1], [0, 0, 1, 1], [], []>} : vector<8x128xbf16>, vector<128x128xbf16>, vector<8x128xf32> -> vector<8x128xf32>
    %c0_10 = arith.constant 0 : index
    %c0_11 = arith.constant 0 : index
    %15 = vector.load %arg5[%c0_10, %c0_11] : memref<1x128xf32, #tpu.memory_space<vmem>>, vector<1x128xf32>
    %16 = vector.broadcast %15 : vector<1x128xf32> to vector<8x128xf32>
    %17 = arith.addf %14, %16 : vector<8x128xf32>
    %c0_12 = arith.constant 0 : index
    %c0_13 = arith.constant 0 : index
    %18 = vector.load %arg6[%c0_12, %c0_13] : memref<128x128xbf16, #tpu.memory_space<vmem>>, vector<128x128xbf16>
    %cst_14 = arith.constant dense<0.000000e+00> : vector<8x128xf32>
    %19 = tpu.matmul %0, %18, %cst_14 {dimension_numbers = #tpu.dot_dimension_numbers<[1], [0], [0], [1], [0, 0, 1, 1], [], []>} : vector<8x128xbf16>, vector<128x128xbf16>, vector<8x128xf32> -> vector<8x128xf32>
    %20 = arith.addf %19, %17 : vector<8x128xf32>
    %c0_15 = arith.constant 0 : index
    %c0_16 = arith.constant 0 : index
    %21 = vector.load %arg7[%c0_15, %c0_16] : memref<8x128xf32, #tpu.memory_space<vmem>>, vector<8x128xf32>
    tpu.vector_store %arg7[%c0_15, %c0_16], %20 {strides = array<i32>} : memref<8x128xf32, #tpu.memory_space<vmem>>, vector<8x128xf32>,
    return
  }
  func.func @transform_0(%arg0: i32) -> (i32, i32) {
    %c0_i32 = arith.constant 0 : i32
    %c0_i32_0 = arith.constant 0 : i32
    return %arg0, %c0_i32 : i32, i32
  }
  func.func @transform_1(%arg0: i32) -> (i32, i32) {
    %c0_i32 = arith.constant 0 : i32
    %c0_i32_0 = arith.constant 0 : i32
    %c0_i32_1 = arith.constant 0 : i32
    return %c0_i32, %c0_i32_0 : i32, i32
  }
  func.func @transform_2(%arg0: i32) -> (i32, i32) {
    %c0_i32 = arith.constant 0 : i32
    %c0_i32_0 = arith.constant 0 : i32
    %c0_i32_1 = arith.constant 0 : i32
    return %c0_i32, %c0_i32_0 : i32, i32
  }
  func.func @transform_3(%arg0: i32) -> (i32, i32) {
    %c0_i32 = arith.constant 0 : i32
    %c0_i32_0 = arith.constant 0 : i32
    %c0_i32_1 = arith.constant 0 : i32
    return %c0_i32, %c0_i32_0 : i32, i32
  }
  func.func @transform_4(%arg0: i32) -> (i32, i32) {
    %c0_i32 = arith.constant 0 : i32
    %c0_i32_0 = arith.constant 0 : i32
    %c0_i32_1 = arith.constant 0 : i32
    return %c0_i32, %c0_i32_0 : i32, i32
  }
  func.func @transform_5(%arg0: i32) -> (i32, i32) {
    %c0_i32 = arith.constant 0 : i32
    %c0_i32_0 = arith.constant 0 : i32
    %c0_i32_1 = arith.constant 0 : i32
    return %c0_i32, %c0_i32_0 : i32, i32
  }
  func.func @transform_6(%arg0: i32) -> (i32, i32) {
    %c0_i32 = arith.constant 0 : i32
    %c0_i32_0 = arith.constant 0 : i32
    return %arg0, %c0_i32 : i32, i32
  }
}

</mosaic_0001>

<llo_original>
// kernel: _resnet_block_fc_impl.1
$region0: #{_resnet_block_fc_impl.1}
  #allocation0 [shape = 'u32[]', space=smem, size = 0x4, offset = 0x4, fixed_abs, tag = 'smem constant byte address 0x4 - core index']
  #allocation1 [shape = 'u32[144,128]{1,0:T(1,128)}', space=vmem, size = 0x12000, scoped, tag = 'internal scratch']
  %s0 = inlined_call_operand.vmem [shape: bf16[16,128], index: 0, kind: input, shape index: {}]
  %s1 = inlined_call_operand.hbm [shape: bf16[128,128], index: 1, kind: input, shape index: {}]
  %s2 = inlined_call_operand.vmem [shape: f32[1,128], index: 2, kind: input, shape index: {}]
  %s3 = inlined_call_operand.hbm [shape: bf16[128,128], index: 3, kind: input, shape index: {}]
  %s4 = inlined_call_operand.vmem [shape: f32[1,128], index: 4, kind: input, shape index: {}]
  %s5 = inlined_call_operand.hbm [shape: bf16[128,128], index: 5, kind: input, shape index: {}]
  %s6 = inlined_call_operand.vmem [shape: f32[16,128], index: 6, kind: output, shape index: {}]
  %s7 = sld [smem:[#allocation0]]
  $region69: #{_resnet_block_fc_impl.1} parent=0
    _
  %s9 = ssub.s32 1, %s7
  %s10 = scalar_select 0, %s9, %s7
  $region1: #{_resnet_block_fc_impl.1} parent=0
    #allocation2 [shape = 'u8[32768]{0}', space=vmem, size = 0x8000, scoped, tag = 'input window, operand 1, single buffered']
    #allocation3 [shape = 's32[2]{0}', space=sflag, size = 0x8, scoped, tag = 'scoped memory for _resnet_block_fc_impl.1']
    #allocation4 [shape = 'u8[32768]{0}', space=vmem, size = 0x8000, scoped, tag = 'input window, operand 3, single buffered']
    #allocation5 [shape = 's32[1]{0}', space=sflag, size = 0x4, scoped, tag = 'scoped memory for _resnet_block_fc_impl.1']
    #allocation6 [shape = 'u8[32768]{0}', space=vmem, size = 0x8000, scoped, tag = 'input window, operand 5, single buffered']
    %11 = vsyncpa [#allocation3], 0
    %12 = vsyncpa [#allocation5], 0
    loop: start=0, step=1, limit=4
    $region2: #{_resnet_block_fc_impl.1} parent=1 // loop_pre_header
      _
    $region3: #{_resnet_block_fc_impl.1} parent=1 // loop_header
      %s14 = sphi 0, %s18
      %p15 = scmp.ge.s32.totalorder %s14, 4
      %s24 = sphi 0, %s26
      %s27 = sphi 0, %s24
      %s28 = sphi 0, %s27
      %s44 = sphi 0, %s28
      %s48 = sphi 0, %s48
      %s50 = sphi 0, %s48
      %s51 = sphi 0, %s50
      %s65 = sphi 0, %s51
      %s69 = sphi 0, %s69
      %s71 = sphi 0, %s69
      %s72 = sphi 0, %s71
      %s86 = sphi 0, %s72
      %s90 = sphi 0, %s90
      %s92 = sphi 0, %s90
      %s93 = sphi 0, %s92
      %s107 = sphi 0, %s93
      %s111 = sphi 0, %s111
      %s113 = sphi 0, %s111
      %s114 = sphi 0, %s113
      %s128 = sphi 0, %s114
      %s132 = sphi 0, %s132
      %s134 = sphi 0, %s132
      %s135 = sphi 0, %s134
      %s149 = sphi 0, %s135
      %s155 = sphi 0, %s157
      %s158 = sphi 0, %s155
      %s159 = sphi 0, %s158
      %s175 = sphi 0, %s159
    $region4: #{_resnet_block_fc_impl.1} parent=1 // loop_header_branch
      %17 = sbr.rel (%p15) target = $region8
    $region5: #{_resnet_block_fc_impl.1} parent=1 // loop_body
      %s19 = ssub.s32 %s14, 1
      %s20 = ssub.s32 %s14, 2
      %s21 = sadd.s32 %s14, 1
      %s22 = ssub.s32 %s14, %s21
      %p23 = scmp.eq.s32.totalorder %s22, 0
      %s25 = sadd.s32 %s24, 1
      %s26 = scalar_select %p23, %s24, %s25
      %p29 = pneg %p23
      %p30 = scmp.eq.s32.totalorder %s14, 1
      %p31 = por %p29, %p30
      %p32 = scmp.ne.s32.totalorder %s24, %s27
      %p33 = scmp.eq.s32.totalorder %s14, 0
      %p34 = por %p32, %p33
      %p35 = scmp.ne.s32.totalorder %s24, %s27
      %p36 = scmp.eq.s32.totalorder %s19, 1
      %p37 = por %p35, %p36
      %p38 = scmp.ne.s32.totalorder %s27, %s28
      %p39 = scmp.eq.s32.totalorder %s19, 0
      %p40 = por %p38, %p39
      %p41 = scmp.ne.s32.totalorder %s27, %s28
      %p42 = scmp.eq.s32.totalorder %s20, 1
      %p43 = por %p41, %p42
      %p45 = scmp.ne.s32.totalorder %s28, %s44
      %p46 = scmp.eq.s32.totalorder %s20, 0
      %p47 = por %p45, %p46
      %s49 = sadd.s32 %s48, 1
      %p52 = scmp.eq.s32.totalorder %s14, 1
      %p53 = scmp.ne.s32.totalorder %s48, %s50
      %p54 = scmp.eq.s32.totalorder %s14, 0
      %p55 = por %p53, %p54
      %p56 = scmp.ne.s32.totalorder %s48, %s50
      %p57 = scmp.eq.s32.totalorder %s19, 1
      %p58 = por %p56, %p57
      %p59 = scmp.ne.s32.totalorder %s50, %s51
      %p60 = scmp.eq.s32.totalorder %s19, 0
      %p61 = por %p59, %p60
      %p62 = scmp.ne.s32.totalorder %s50, %s51
      %p63 = scmp.eq.s32.totalorder %s20, 1
      %p64 = por %p62, %p63
      %p66 = scmp.ne.s32.totalorder %s51, %s65
      %p67 = scmp.eq.s32.totalorder %s20, 0
      %p68 = por %p66, %p67
      %s70 = sadd.s32 %s69, 1
      %p73 = scmp.eq.s32.totalorder %s14, 1
      %p74 = scmp.ne.s32.totalorder %s69, %s71
      %p75 = scmp.eq.s32.totalorder %s14, 0
      %p76 = por %p74, %p75
      %p77 = scmp.ne.s32.totalorder %s69, %s71
      %p78 = scmp.eq.s32.totalorder %s19, 1
      %p79 = por %p77, %p78
      %p80 = scmp.ne.s32.totalorder %s71, %s72
      %p81 = scmp.eq.s32.totalorder %s19, 0
      %p82 = por %p80, %p81
      %p83 = scmp.ne.s32.totalorder %s71, %s72
      %p84 = scmp.eq.s32.totalorder %s20, 1
      %p85 = por %p83, %p84
      %p87 = scmp.ne.s32.totalorder %s72, %s86
      %p88 = scmp.eq.s32.totalorder %s20, 0
      %p89 = por %p87, %p88
      %s91 = sadd.s32 %s90, 1
      %p94 = scmp.eq.s32.totalorder %s14, 1
      %p95 = scmp.ne.s32.totalorder %s90, %s92
      %p96 = scmp.eq.s32.totalorder %s14, 0
      %p97 = por %p95, %p96
      %p98 = scmp.ne.s32.totalorder %s90, %s92
      %p99 = scmp.eq.s32.totalorder %s19, 1
      %p100 = por %p98, %p99
      %p101 = scmp.ne.s32.totalorder %s92, %s93
      %p102 = scmp.eq.s32.totalorder %s19, 0
      %p103 = por %p101, %p102
      %p104 = scmp.ne.s32.totalorder %s92, %s93
      %p105 = scmp.eq.s32.totalorder %s20, 1
      %p106 = por %p104, %p105
      %p108 = scmp.ne.s32.totalorder %s93, %s107
      %p109 = scmp.eq.s32.totalorder %s20, 0
      %p110 = por %p108, %p109
      %s112 = sadd.s32 %s111, 1
      %p115 = scmp.eq.s32.totalorder %s14, 1
      %p116 = scmp.ne.s32.totalorder %s111, %s113
      %p117 = scmp.eq.s32.totalorder %s14, 0
      %p118 = por %p116, %p117
      %p119 = scmp.ne.s32.totalorder %s111, %s113
      %p120 = scmp.eq.s32.totalorder %s19, 1
      %p121 = por %p119, %p120
      %p122 = scmp.ne.s32.totalorder %s113, %s114
      %p123 = scmp.eq.s32.totalorder %s19, 0
      %p124 = por %p122, %p123
      %p125 = scmp.ne.s32.totalorder %s113, %s114
      %p126 = scmp.eq.s32.totalorder %s20, 1
      %p127 = por %p125, %p126
      %p129 = scmp.ne.s32.totalorder %s114, %s128
      %p130 = scmp.eq.s32.totalorder %s20, 0
      %p131 = por %p129, %p130
      %s133 = sadd.s32 %s132, 1
      %p136 = scmp.eq.s32.totalorder %s14, 1
      %p137 = scmp.ne.s32.totalorder %s132, %s134
      %p138 = scmp.eq.s32.totalorder %s14, 0
      %p139 = por %p137, %p138
      %p140 = scmp.ne.s32.totalorder %s132, %s134
      %p141 = scmp.eq.s32.totalorder %s19, 1
      %p142 = por %p140, %p141
      %p143 = scmp.ne.s32.totalorder %s134, %s135
      %p144 = scmp.eq.s32.totalorder %s19, 0
      %p145 = por %p143, %p144
      %p146 = scmp.ne.s32.totalorder %s134, %s135
      %p147 = scmp.eq.s32.totalorder %s20, 1
      %p148 = por %p146, %p147
      %p150 = scmp.ne.s32.totalorder %s135, %s149
      %p151 = scmp.eq.s32.totalorder %s20, 0
      %p152 = por %p150, %p151
      %s153 = ssub.s32 %s14, %s21
      %p154 = scmp.eq.s32.totalorder %s153, 0
      %s156 = sadd.s32 %s155, 1
      %s157 = scalar_select %p154, %s155, %s156
      %p160 = pneg %p154
      %p161 = scmp.eq.s32.totalorder %s14, 1
      %p162 = por %p160, %p161
      %p163 = scmp.ne.s32.totalorder %s155, %s158
      %p164 = scmp.eq.s32.totalorder %s14, 0
      %p165 = por %p163, %p164
      %p166 = scmp.ne.s32.totalorder %s155, %s158
      %p167 = scmp.eq.s32.totalorder %s19, 1
      %p168 = por %p166, %p167
      %p169 = scmp.ne.s32.totalorder %s158, %s159
      %p170 = scmp.eq.s32.totalorder %s19, 0
      %p171 = por %p169, %p170
      %p172 = scmp.ne.s32.totalorder %s158, %s159
      %p173 = scmp.eq.s32.totalorder %s20, 1
      %p174 = por %p172, %p173
      %p176 = scmp.ne.s32.totalorder %s159, %s175
      %p177 = scmp.eq.s32.totalorder %s20, 0
      %p178 = por %p176, %p177
      %p179 = scmp.le.s32.totalorder 1, %s14
      %p180 = scmp.lt.s32.totalorder %s14, 3
      %p181 = pnand %p179, %p180
      %p182 = pneg %p181
      // Predicated region
      $region9: #{_resnet_block_fc_impl.1} parent=5 // pred_check
        _
      $region10: #{_resnet_block_fc_impl.1} parent=5 // pred_check_branch
        %184 = sbr.rel (%p181) target = $region12
      $region11: #{_resnet_block_fc_impl.1} parent=5 // pred_region
        %s185 = ssub.s32 %s14, 1
        // Predicated region
        $region13: #{_resnet_block_fc_impl.1} parent=11 // pred_check
          %p186 = pneg %p61
        $region14: #{_resnet_block_fc_impl.1} parent=11 // pred_check_branch
          %188 = sbr.rel (%p186) target = $region16
        $region15: #{_resnet_block_fc_impl.1} parent=11 // pred_region
          %s190 = ssub.s32 1024, 1024
          %191 = vsyncadd [#allocation3], %s190
          %s192 = sshll.u32 [#allocation2], 4
          %s193 = int_to_ptr.vmem [resolvable:$true] %s192
          %198 = dma.hbm_to_vmem [thread:$0]  %s1, 1024, %s193, [#allocation3], 64, 64, 4
        $region16: #{_resnet_block_fc_impl.1} parent=11 // pred_fallthru
          _
        // Predicated region
        $region17: #{_resnet_block_fc_impl.1} parent=11 // pred_check
          %p199 = pneg %p82
        $region18: #{_resnet_block_fc_impl.1} parent=11 // pred_check_branch
          %201 = sbr.rel (%p199) target = $region20
        $region19: #{_resnet_block_fc_impl.1} parent=11 // pred_region
          _
        $region20: #{_resnet_block_fc_impl.1} parent=11 // pred_fallthru
          _
        // Predicated region
        $region21: #{_resnet_block_fc_impl.1} parent=11 // pred_check
          %p202 = pneg %p103
        $region22: #{_resnet_block_fc_impl.1} parent=11 // pred_check_branch
          %204 = sbr.rel (%p202) target = $region24
        $region23: #{_resnet_block_fc_impl.1} parent=11 // pred_region
          %s206 = ssub.s32 1024, 1024
          %207 = vsyncadd [#allocation5], %s206
          %s208 = sshll.u32 [#allocation4], 4
          %s209 = int_to_ptr.vmem [resolvable:$true] %s208
          %214 = dma.hbm_to_vmem [thread:$0]  %s3, 1024, %s209, [#allocation5], 64, 64, 4
        $region24: #{_resnet_block_fc_impl.1} parent=11 // pred_fallthru
          _
        // Predicated region
        $region25: #{_resnet_block_fc_impl.1} parent=11 // pred_check
          %p215 = pneg %p124
        $region26: #{_resnet_block_fc_impl.1} parent=11 // pred_check_branch
          %217 = sbr.rel (%p215) target = $region28
        $region27: #{_resnet_block_fc_impl.1} parent=11 // pred_region
          _
        $region28: #{_resnet_block_fc_impl.1} parent=11 // pred_fallthru
          _
        // Predicated region
        $region29: #{_resnet_block_fc_impl.1} parent=11 // pred_check
          %p218 = pneg %p145
        $region30: #{_resnet_block_fc_impl.1} parent=11 // pred_check_branch
          %220 = sbr.rel (%p218) target = $region32
        $region31: #{_resnet_block_fc_impl.1} parent=11 // pred_region
          %s222 = ssub.s32 1024, 1024
          %223 = vsyncadd [#allocation5], %s222
          %s224 = sshll.u32 [#allocation6], 4
          %s225 = int_to_ptr.vmem [resolvable:$true] %s224
          %230 = dma.hbm_to_vmem [thread:$0]  %s5, 1024, %s225, [#allocation5], 64, 64, 4
        $region32: #{_resnet_block_fc_impl.1} parent=11 // pred_fallthru
          _
      $region12: #{_resnet_block_fc_impl.1} parent=5 // pred_fallthru
        _
      %p231 = scmp.lt.s32.totalorder %s14, 2
      // Predicated region
      $region33: #{_resnet_block_fc_impl.1} parent=5 // pred_check
        %p232 = pneg %p231
      $region34: #{_resnet_block_fc_impl.1} parent=5 // pred_check_branch
        %234 = sbr.rel (%p232) target = $region36
      $region35: #{_resnet_block_fc_impl.1} parent=5 // pred_region
        // Predicated region
        $region37: #{_resnet_block_fc_impl.1} parent=35 // pred_check
          %p235 = pneg %p34
        $region38: #{_resnet_block_fc_impl.1} parent=35 // pred_check_branch
          %237 = sbr.rel (%p235) target = $region40
        $region39: #{_resnet_block_fc_impl.1} parent=35 // pred_region
          %p238 = scmp.lt.s32.totalorder %s14, 1
          %s239 = scalar_select %p238, %s14, 1
          %s240 = smul.addr %s239, 4
          %s241 = scalar_lea.vmem %s0, %s240
        $region40: #{_resnet_block_fc_impl.1} parent=35 // pred_fallthru
          _
      $region36: #{_resnet_block_fc_impl.1} parent=5 // pred_fallthru
        _
      %p242 = scmp.le.s32.totalorder 1, %s14
      %p243 = scmp.lt.s32.totalorder %s14, 3
      %p244 = pnand %p242, %p243
      %p245 = pneg %p244
      // Predicated region
      $region41: #{_resnet_block_fc_impl.1} parent=5 // pred_check
        _
      $region42: #{_resnet_block_fc_impl.1} parent=5 // pred_check_branch
        %247 = sbr.rel (%p244) target = $region44
      $region43: #{_resnet_block_fc_impl.1} parent=5 // pred_region
        %s248 = ssub.s32 %s14, 1
        // Predicated region
        $region45: #{_resnet_block_fc_impl.1} parent=43 // pred_check
          %p249 = pneg %p61
        $region46: #{_resnet_block_fc_impl.1} parent=43 // pred_check_branch
          %251 = sbr.rel (%p249) target = $region48
        $region47: #{_resnet_block_fc_impl.1} parent=43 // pred_region
          %252 = dma.done [#allocation3], 1024
        $region48: #{_resnet_block_fc_impl.1} parent=43 // pred_fallthru
          _
        // Predicated region
        $region49: #{_resnet_block_fc_impl.1} parent=43 // pred_check
          %p253 = pneg %p103
        $region50: #{_resnet_block_fc_impl.1} parent=43 // pred_check_branch
          %255 = sbr.rel (%p253) target = $region52
        $region51: #{_resnet_block_fc_impl.1} parent=43 // pred_region
          %256 = dma.done [#allocation5], 1024
        $region52: #{_resnet_block_fc_impl.1} parent=43 // pred_fallthru
          _
        // Predicated region
        $region53: #{_resnet_block_fc_impl.1} parent=43 // pred_check
          %p257 = pneg %p145
        $region54: #{_resnet_block_fc_impl.1} parent=43 // pred_check_branch
          %259 = sbr.rel (%p257) target = $region56
        $region55: #{_resnet_block_fc_impl.1} parent=43 // pred_region
          %260 = dma.done [#allocation5], 1024
        $region56: #{_resnet_block_fc_impl.1} parent=43 // pred_fallthru
          _
        %p261 = scmp.lt.s32.totalorder %s19, 1
        %s262 = scalar_select %p261, %s19, 1
        %s263 = smul.addr %s262, 4
        %s264 = scalar_lea.vmem %s0, %s263
        %p265 = pneg %p40
        %p266 = pneg %p37
        %p267 = pneg %p61
        %p268 = pneg %p58
        %p269 = pneg %p82
        %p270 = pneg %p79
        %p271 = pneg %p103
        %p272 = pneg %p100
        %p273 = pneg %p124
        %p274 = pneg %p121
        %p275 = pneg %p145
        %p276 = pneg %p142
        %p277 = pneg %p171
        %p278 = pneg %p168
        %p279 = scmp.lt.s32.totalorder %s19, 1
        %s280 = scalar_select %p279, %s19, 1
        %s281 = smul.addr %s280, 8
        %s282 = scalar_lea.vmem %s6, %s281
        %p283 = scmp.lt.s32.totalorder %s19, 1
        %s284 = scalar_select %p283, %s19, 1
        %s285 = smul.addr %s284, 4
        %s286 = scalar_lea.vmem %s0, %s285
        %p287 = scmp.lt.s32.totalorder %s19, 1
        %s288 = scalar_select %p287, %s19, 1
        %s289 = smul.addr %s288, 8
        %s290 = scalar_lea.vmem %s6, %s289
        %v292 = vld [vmem:[%s286] sm:$0xf]
        %v293 = vunpack.c.l.bf16 %v292
        %v294 = vmax.f32 %v293, 0.0
        %v295 = vpack.c.bf16 %v294, %v294
        %v296 = vld [vmem:[#allocation2] sm:$0xf]
        %v297 = vld [vmem:[#allocation2 + $0x4] sm:$0xf]
        %v298 = vld [vmem:[#allocation2 + $0x8] sm:$0xf]
        %v299 = vld [vmem:[#allocation2 + $0xc] sm:$0xf]
        %v300 = vld [vmem:[#allocation2 + $0x10] sm:$0xf]
        %v301 = vld [vmem:[#allocation2 + $0x14] sm:$0xf]
        %v302 = vld [vmem:[#allocation2 + $0x18] sm:$0xf]
        %v303 = vld [vmem:[#allocation2 + $0x1c] sm:$0xf]
        %v304 = vld [vmem:[#allocation2 + $0x20] sm:$0xf]
        %v305 = vld [vmem:[#allocation2 + $0x24] sm:$0xf]
        %v306 = vld [vmem:[#allocation2 + $0x28] sm:$0xf]
        %v307 = vld [vmem:[#allocation2 + $0x2c] sm:$0xf]
        %v308 = vld [vmem:[#allocation2 + $0x30] sm:$0xf]
        %v309 = vld [vmem:[#allocation2 + $0x34] sm:$0xf]
        %v310 = vld [vmem:[#allocation2 + $0x38] sm:$0xf]
        %v311 = vld [vmem:[#allocation2 + $0x3c] sm:$0xf]
        %v312 = vld [vmem:[%s2] sm:$0x1]
        %v314 = vlaneseq
        %v315 = vshrl.u32 %v314, 7
        %v316 = vsub.s32 0, %v315
        %v317 = vrot.slane %v312, %v316
        %v335 = vunpack.c.l.b16 %v296
        %v336 = vunpack.c.l.b16 %v297
        %v337 = vunpack.c.l.b16 %v298
        %v338 = vunpack.c.l.b16 %v299
        %v339 = vunpack.c.l.b16 %v300
        %v340 = vunpack.c.l.b16 %v301
        %v341 = vunpack.c.l.b16 %v302
        %v342 = vunpack.c.l.b16 %v303
        %v343 = vunpack.c.l.b16 %v304
        %v344 = vunpack.c.l.b16 %v305
        %v345 = vunpack.c.l.b16 %v306
        %v346 = vunpack.c.l.b16 %v307
        %v347 = vunpack.c.l.b16 %v308
        %v348 = vunpack.c.l.b16 %v309
        %v349 = vunpack.c.l.b16 %v310
        %v350 = vunpack.c.l.b16 %v311
        %v351 = vpack.c.b16 %v336, %v335
        %v352 = vpack.c.b16 %v338, %v337
        %v353 = vpack.c.b16 %v340, %v339
        %v354 = vpack.c.b16 %v342, %v341
        %v355 = vpack.c.b16 %v344, %v343
        %v356 = vpack.c.b16 %v346, %v345
        %v357 = vpack.c.b16 %v348, %v347
        %v358 = vpack.c.b16 %v350, %v349
        %367 = vmatprep.subr.bf16.mxu0 0
        %368 = vmatpush1.bf16.msra.mxu0 %v351
        %369 = vmatprep.subr.bf16.mxu0 0
        %370 = vmatpush1.bf16.msra.mxu0 %v352
        %371 = vmatprep.subr.bf16.mxu0 0
        %372 = vmatpush1.bf16.msra.mxu0 %v353
        %373 = vmatprep.subr.bf16.mxu0 0
        %374 = vmatpush1.bf16.msra.mxu0 %v354
        %375 = vmatprep.subr.bf16.mxu0 0
        %376 = vmatpush1.bf16.msra.mxu0 %v355
        %377 = vmatprep.subr.bf16.mxu0 0
        %378 = vmatpush1.bf16.msra.mxu0 %v356
        %379 = vmatprep.subr.bf16.mxu0 0
        %380 = vmatpush1.bf16.msra.mxu0 %v357
        %381 = vmatprep.subr.bf16.mxu0 0
        %382 = vmatpush1.bf16.msra.mxu0 %v358
        %383 = vmatprep.subr.bf16.mxu0 0
        %384 = vmatpush1.bf16.msra.mxu0 0
        %385 = vmatprep.subr.bf16.mxu0 0
        %386 = vmatpush1.bf16.msra.mxu0 0
        %387 = vmatprep.subr.bf16.mxu0 0
        %388 = vmatpush1.bf16.msra.mxu0 0
        %389 = vmatprep.subr.bf16.mxu0 0
        %390 = vmatpush1.bf16.msra.mxu0 0
        %391 = vmatprep.subr.bf16.mxu0 0
        %392 = vmatpush1.bf16.msra.mxu0 0
        %393 = vmatprep.subr.bf16.mxu0 0
        %394 = vmatpush1.bf16.msra.mxu0 0
        %395 = vmatprep.subr.bf16.mxu0 0
        %396 = vmatpush1.bf16.msra.mxu0 0
        %397 = vmatprep.subr.bf16.mxu0 0
        %398 = vmatpush1.bf16.msra.mxu0 0
        %399 = vmatprep.mubr.bf16.mxu0 0
        %400 = vmatmul.mubr.bf16.gmra.mrb[0].mxu0 %v295
        %v401 = vpop.f32.mrb[0].mxu0
        %v402 = vadd.f32 %v317, %v401
        %v403 = vpop.f32.mrb[0].mxu0
        %v404 = vpop.f32.mrb[0].mxu0
        %v405 = vpop.f32.mrb[0].mxu0
        %406 = vdwg.mxu0
        %v407 = vmax.f32 %v402, 0.0
        %v408 = vpack.c.bf16 %v407, %v407
        %v409 = vld [vmem:[#allocation4] sm:$0xf]
        %v410 = vld [vmem:[#allocation4 + $0x4] sm:$0xf]
        %v411 = vld [vmem:[#allocation4 + $0x8] sm:$0xf]
        %v412 = vld [vmem:[#allocation4 + $0xc] sm:$0xf]
        %v413 = vld [vmem:[#allocation4 + $0x10] sm:$0xf]
        %v414 = vld [vmem:[#allocation4 + $0x14] sm:$0xf]
        %v415 = vld [vmem:[#allocation4 + $0x18] sm:$0xf]
        %v416 = vld [vmem:[#allocation4 + $0x1c] sm:$0xf]
        %v417 = vld [vmem:[#allocation4 + $0x20] sm:$0xf]
        %v418 = vld [vmem:[#allocation4 + $0x24] sm:$0xf]
        %v419 = vld [vmem:[#allocation4 + $0x28] sm:$0xf]
        %v420 = vld [vmem:[#allocation4 + $0x2c] sm:$0xf]
        %v421 = vld [vmem:[#allocation4 + $0x30] sm:$0xf]
        %v422 = vld [vmem:[#allocation4 + $0x34] sm:$0xf]
        %v423 = vld [vmem:[#allocation4 + $0x38] sm:$0xf]
        %v424 = vld [vmem:[#allocation4 + $0x3c] sm:$0xf]
        %v425 = vld [vmem:[%s4] sm:$0x1]
        %v427 = vlaneseq
        %v428 = vshrl.u32 %v427, 7
        %v429 = vsub.s32 0, %v428
        %v430 = vrot.slane %v425, %v429
        %v448 = vunpack.c.l.b16 %v409
        %v449 = vunpack.c.l.b16 %v410
        %v450 = vunpack.c.l.b16 %v411
        %v451 = vunpack.c.l.b16 %v412
        %v452 = vunpack.c.l.b16 %v413
        %v453 = vunpack.c.l.b16 %v414
        %v454 = vunpack.c.l.b16 %v415
        %v455 = vunpack.c.l.b16 %v416
        %v456 = vunpack.c.l.b16 %v417
        %v457 = vunpack.c.l.b16 %v418
        %v458 = vunpack.c.l.b16 %v419
        %v459 = vunpack.c.l.b16 %v420
        %v460 = vunpack.c.l.b16 %v421
        %v461 = vunpack.c.l.b16 %v422
        %v462 = vunpack.c.l.b16 %v423
        %v463 = vunpack.c.l.b16 %v424
        %v464 = vpack.c.b16 %v449, %v448
        %v465 = vpack.c.b16 %v451, %v450
        %v466 = vpack.c.b16 %v453, %v452
        %v467 = vpack.c.b16 %v455, %v454
        %v468 = vpack.c.b16 %v457, %v456
        %v469 = vpack.c.b16 %v459, %v458
        %v470 = vpack.c.b16 %v461, %v460
        %v471 = vpack.c.b16 %v463, %v462
        %480 = vmatprep.subr.bf16.mxu0 0
        %481 = vmatpush1.bf16.msra.mxu0 %v464
        %482 = vmatprep.subr.bf16.mxu0 0
        %483 = vmatpush1.bf16.msra.mxu0 %v465
        %484 = vmatprep.subr.bf16.mxu0 0
        %485 = vmatpush1.bf16.msra.mxu0 %v466
        %486 = vmatprep.subr.bf16.mxu0 0
        %487 = vmatpush1.bf16.msra.mxu0 %v467
        %488 = vmatprep.subr.bf16.mxu0 0
        %489 = vmatpush1.bf16.msra.mxu0 %v468
        %490 = vmatprep.subr.bf16.mxu0 0
        %491 = vmatpush1.bf16.msra.mxu0 %v469
        %492 = vmatprep.subr.bf16.mxu0 0
        %493 = vmatpush1.bf16.msra.mxu0 %v470
        %494 = vmatprep.subr.bf16.mxu0 0
        %495 = vmatpush1.bf16.msra.mxu0 %v471
        %496 = vmatprep.subr.bf16.mxu0 0
        %497 = vmatpush1.bf16.msra.mxu0 0
        %498 = vmatprep.subr.bf16.mxu0 0
        %499 = vmatpush1.bf16.msra.mxu0 0
        %500 = vmatprep.subr.bf16.mxu0 0
        %501 = vmatpush1.bf16.msra.mxu0 0
        %502 = vmatprep.subr.bf16.mxu0 0
        %503 = vmatpush1.bf16.msra.mxu0 0
        %504 = vmatprep.subr.bf16.mxu0 0
        %505 = vmatpush1.bf16.msra.mxu0 0
        %506 = vmatprep.subr.bf16.mxu0 0
        %507 = vmatpush1.bf16.msra.mxu0 0
        %508 = vmatprep.subr.bf16.mxu0 0
        %509 = vmatpush1.bf16.msra.mxu0 0
        %510 = vmatprep.subr.bf16.mxu0 0
        %511 = vmatpush1.bf16.msra.mxu0 0
        %512 = vmatprep.mubr.bf16.mxu0 0
        %513 = vmatmul.mubr.bf16.gmra.mrb[0].mxu0 %v408
        %v514 = vpop.f32.mrb[0].mxu0
        %v515 = vadd.f32 %v430, %v514
        %v516 = vpop.f32.mrb[0].mxu0
        %v517 = vpop.f32.mrb[0].mxu0
        %v518 = vpop.f32.mrb[0].mxu0
        %519 = vdwg.mxu0
        %v520 = vld [vmem:[#allocation6] sm:$0xf]
        %v521 = vld [vmem:[#allocation6 + $0x4] sm:$0xf]
        %v522 = vld [vmem:[#allocation6 + $0x8] sm:$0xf]
        %v523 = vld [vmem:[#allocation6 + $0xc] sm:$0xf]
        %v524 = vld [vmem:[#allocation6 + $0x10] sm:$0xf]
        %v525 = vld [vmem:[#allocation6 + $0x14] sm:$0xf]
        %v526 = vld [vmem:[#allocation6 + $0x18] sm:$0xf]
        %v527 = vld [vmem:[#allocation6 + $0x1c] sm:$0xf]
        %v528 = vld [vmem:[#allocation6 + $0x20] sm:$0xf]
        %v529 = vld [vmem:[#allocation6 + $0x24] sm:$0xf]
        %v530 = vld [vmem:[#allocation6 + $0x28] sm:$0xf]
        %v531 = vld [vmem:[#allocation6 + $0x2c] sm:$0xf]
        %v532 = vld [vmem:[#allocation6 + $0x30] sm:$0xf]
        %v533 = vld [vmem:[#allocation6 + $0x34] sm:$0xf]
        %v534 = vld [vmem:[#allocation6 + $0x38] sm:$0xf]
        %v535 = vld [vmem:[#allocation6 + $0x3c] sm:$0xf]
        %v552 = vunpack.c.l.b16 %v520
        %v553 = vunpack.c.l.b16 %v521
        %v554 = vunpack.c.l.b16 %v522
        %v555 = vunpack.c.l.b16 %v523
        %v556 = vunpack.c.l.b16 %v524
        %v557 = vunpack.c.l.b16 %v525
        %v558 = vunpack.c.l.b16 %v526
        %v559 = vunpack.c.l.b16 %v527
        %v560 = vunpack.c.l.b16 %v528
        %v561 = vunpack.c.l.b16 %v529
        %v562 = vunpack.c.l.b16 %v530
        %v563 = vunpack.c.l.b16 %v531
        %v564 = vunpack.c.l.b16 %v532
        %v565 = vunpack.c.l.b16 %v533
        %v566 = vunpack.c.l.b16 %v534
        %v567 = vunpack.c.l.b16 %v535
        %v568 = vpack.c.b16 %v553, %v552
        %v569 = vpack.c.b16 %v555, %v554
        %v570 = vpack.c.b16 %v557, %v556
        %v571 = vpack.c.b16 %v559, %v558
        %v572 = vpack.c.b16 %v561, %v560
        %v573 = vpack.c.b16 %v563, %v562
        %v574 = vpack.c.b16 %v565, %v564
        %v575 = vpack.c.b16 %v567, %v566
        %584 = vmatprep.subr.bf16.mxu0 0
        %585 = vmatpush1.bf16.msra.mxu0 %v568
        %586 = vmatprep.subr.bf16.mxu0 0
        %587 = vmatpush1.bf16.msra.mxu0 %v569
        %588 = vmatprep.subr.bf16.mxu0 0
        %589 = vmatpush1.bf16.msra.mxu0 %v570
        %590 = vmatprep.subr.bf16.mxu0 0
        %591 = vmatpush1.bf16.msra.mxu0 %v571
        %592 = vmatprep.subr.bf16.mxu0 0
        %593 = vmatpush1.bf16.msra.mxu0 %v572
        %594 = vmatprep.subr.bf16.mxu0 0
        %595 = vmatpush1.bf16.msra.mxu0 %v573
        %596 = vmatprep.subr.bf16.mxu0 0
        %597 = vmatpush1.bf16.msra.mxu0 %v574
        %598 = vmatprep.subr.bf16.mxu0 0
        %599 = vmatpush1.bf16.msra.mxu0 %v575
        %600 = vmatprep.subr.bf16.mxu0 0
        %601 = vmatpush1.bf16.msra.mxu0 0
        %602 = vmatprep.subr.bf16.mxu0 0
        %603 = vmatpush1.bf16.msra.mxu0 0
        %604 = vmatprep.subr.bf16.mxu0 0
        %605 = vmatpush1.bf16.msra.mxu0 0
        %606 = vmatprep.subr.bf16.mxu0 0
        %607 = vmatpush1.bf16.msra.mxu0 0
        %608 = vmatprep.subr.bf16.mxu0 0
        %609 = vmatpush1.bf16.msra.mxu0 0
        %610 = vmatprep.subr.bf16.mxu0 0
        %611 = vmatpush1.bf16.msra.mxu0 0
        %612 = vmatprep.subr.bf16.mxu0 0
        %613 = vmatpush1.bf16.msra.mxu0 0
        %614 = vmatprep.subr.bf16.mxu0 0
        %615 = vmatpush1.bf16.msra.mxu0 0
        %616 = vmatprep.mubr.bf16.mxu0 0
        %617 = vmatmul.mubr.bf16.gmra.mrb[0].mxu0 %v292
        %v618 = vpop.f32.mrb[0].mxu0
        %v619 = vadd.f32 %v515, %v618
        %v620 = vpop.f32.mrb[0].mxu0
        %v621 = vpop.f32.mrb[0].mxu0
        %v622 = vpop.f32.mrb[0].mxu0
        %623 = vdwg.mxu0
        %624 = vst [vmem:[%s290] sm:$0xff] %v619
        %p625 = scmp.lt.s32.totalorder %s19, 1
        %s626 = scalar_select %p625, %s19, 1
        %s627 = smul.addr %s626, 8
        %s628 = scalar_lea.vmem %s6, %s627
        // Predicated region
        $region57: #{_resnet_block_fc_impl.1} parent=43 // pred_check
          %p629 = pneg %p168
        $region58: #{_resnet_block_fc_impl.1} parent=43 // pred_check_branch
          %631 = sbr.rel (%p629) target = $region60
        $region59: #{_resnet_block_fc_impl.1} parent=43 // pred_region
          _
        $region60: #{_resnet_block_fc_impl.1} parent=43 // pred_fallthru
          _
      $region44: #{_resnet_block_fc_impl.1} parent=5 // pred_fallthru
        _
      %p632 = scmp.le.s32.totalorder 2, %s14
      // Predicated region
      $region61: #{_resnet_block_fc_impl.1} parent=5 // pred_check
        %p633 = pneg %p632
      $region62: #{_resnet_block_fc_impl.1} parent=5 // pred_check_branch
        %635 = sbr.rel (%p633) target = $region64
      $region63: #{_resnet_block_fc_impl.1} parent=5 // pred_region
        %s636 = ssub.s32 %s14, 2
        // Predicated region
        $region65: #{_resnet_block_fc_impl.1} parent=63 // pred_check
          %p637 = pneg %p174
        $region66: #{_resnet_block_fc_impl.1} parent=63 // pred_check_branch
          %639 = sbr.rel (%p637) target = $region68
        $region67: #{_resnet_block_fc_impl.1} parent=63 // pred_region
          %p640 = scmp.lt.s32.totalorder %s20, 1
          %s641 = scalar_select %p640, %s20, 1
          %s642 = smul.addr %s641, 8
          %s643 = scalar_lea.vmem %s6, %s642
        $region68: #{_resnet_block_fc_impl.1} parent=63 // pred_fallthru
          _
      $region64: #{_resnet_block_fc_impl.1} parent=5 // pred_fallthru
        _
    $region6: #{_resnet_block_fc_impl.1} parent=1 // loop_footer
      %s18 = sadd.s32 1, %s14
    $region7: #{_resnet_block_fc_impl.1} parent=1 // loop_footer_branch
      %13 = sbr.rel target = $region3
    $region8: #{_resnet_block_fc_impl.1} parent=1 // loop_exit
      _
    %644 = vsyncpa [#allocation3], 1
    %s645 = scalar_lea.sflag [#allocation3], 1
    %646 = vsyncpa %s645, 1
    %647 = vsyncpa [#allocation5], 1

</llo_original>
